<compile_context>
chip_gen: v6e
topology: v6e:2x2x1
jax: 0.10.0
libtpu: 0.0.40
codegen_flags: <defaults>
</compile_context>

<pallas_src>
import functools

import jax
import jax.numpy as jnp
from jax.experimental import pallas as pl
from jax.experimental.pallas import tpu as pltpu


def _round_up(x, m):
    return ((x + m - 1) // m) * m


def _make_critic_kernel(reduce_fc3):
    def kernel(s_ref, a_ref, w1s_ref, w1a_ref, b1_ref, w2_ref, b2_ref,
               w3_ref, b3_ref, out_ref):
        wdt = w1s_ref.dtype  # matmul operand dtype (f32 or bf16); accumulation is f32

        s = s_ref[...].astype(wdt)
        a = a_ref[...].astype(wdt)

        # fc1 on the "concatenated" input, expressed as two matmuls (no concat).
        h1 = (jnp.dot(s, w1s_ref[...], preferred_element_type=jnp.float32)
              + jnp.dot(a, w1a_ref[...], preferred_element_type=jnp.float32)
              + b1_ref[...])
        h1 = jnp.maximum(h1, 0.0)                     # f32 element-wise (VPU)

        # fc2
        h2 = jnp.dot(h1.astype(wdt), w2_ref[...],
                     preferred_element_type=jnp.float32) + b2_ref[...]
        h2 = jnp.maximum(h2, 0.0)

        # fc3
        if reduce_fc3:
            # out_dim == 1: VPU multiply + lane reduction instead of an N=1
            # MXU matmul (keeps the MXU for the two real matmuls).
            out = jnp.sum(h2 * w3_ref[...], axis=-1, keepdims=True) + b3_ref[...]
        else:
            out = jnp.dot(h2.astype(w3_ref.dtype), w3_ref[...],
                          preferred_element_type=jnp.float32) + b3_ref[...]

        out_ref[...] = out.astype(out_ref.dtype)

    return kernel


def init_critic_params(key, state_dim, action_dim, output_dim):
    """PyTorch nn.Linear-style init (uniform +/- 1/sqrt(fan_in)), logical shapes."""
    def linear_init(k, fan_in, fan_out):
        kw, kb = jax.random.split(k)
        bound = 1.0 / jnp.sqrt(jnp.float32(fan_in))
        w = jax.random.uniform(kw, (fan_in, fan_out), jnp.float32, -bound, bound)
        b = jax.random.uniform(kb, (fan_out,), jnp.float32, -bound, bound)
        return w, b

    input_dim = state_dim + action_dim
    k1, k2, k3 = jax.random.split(key, 3)
    w1, b1 = linear_init(k1, input_dim, 400)
    w2, b2 = linear_init(k2, 400, 300)
    w3, b3 = linear_init(k3, 300, output_dim)
    return {"w1": w1, "b1": b1, "w2": w2, "b2": b2, "w3": w3, "b3": b3}


def prepare_critic_params(params, state_dim, *, compute_dtype=jnp.float32):
    """Pads hidden dims to multiples of 128, splits fc1 into state/action parts
    and casts matmul weights to `compute_dtype`. Padding is exact (zeros)."""
    w1, b1 = params["w1"], params["b1"]
    w2, b2 = params["w2"], params["b2"]
    w3, b3 = params["w3"], params["b3"]

    h1_dim, h2_dim = w1.shape[1], w2.shape[1]
    out_dim = w3.shape[1]
    h1p = _round_up(h1_dim, 128)
    h2p = _round_up(h2_dim, 128)

    w1_s = jnp.pad(w1[:state_dim], ((0, 0), (0, h1p - h1_dim))).astype(compute_dtype)
    w1_a = jnp.pad(w1[state_dim:], ((0, 0), (0, h1p - h1_dim))).astype(compute_dtype)
    b1p = jnp.pad(b1, (0, h1p - h1_dim)).reshape(1, h1p).astype(jnp.float32)

    w2p = jnp.pad(w2, ((0, h1p - h1_dim), (0, h2p - h2_dim))).astype(compute_dtype)
    b2p = jnp.pad(b2, (0, h2p - h2_dim)).reshape(1, h2p).astype(jnp.float32)

    if out_dim == 1:
        # Stored as a (1, h2p) row for the VPU-reduce fc3 path; kept f32.
        w3p = jnp.pad(w3, ((0, h2p - h2_dim), (0, 0))).reshape(1, h2p).astype(jnp.float32)
    else:
        w3p = jnp.pad(w3, ((0, h2p - h2_dim), (0, 0))).astype(compute_dtype)
    b3p = b3.reshape(1, out_dim).astype(jnp.float32)

    return {"w1_s": w1_s, "w1_a": w1_a, "b1": b1p,
            "w2": w2p, "b2": b2p, "w3": w3p, "b3": b3p,
            "out_dim": out_dim}


def _const_spec(arr):
    # Weights/biases: same block every grid step -> stay resident in VMEM.
    return pl.BlockSpec(arr.shape, lambda i: (0, 0))


@functools.partial(jax.jit, static_argnames=("block_rows",))
def critic_forward(state, action, kparams, *, block_rows=512):
    """Critic forward pass as a single batch-tiled Pallas kernel.

    state:  (B, state_dim) float32
    action: (B, action_dim) float32
    kparams: output of prepare_critic_params
    """
    batch, state_dim = state.shape
    action_dim = action.shape[1]
    out_dim = kparams["b3"].shape[-1]
    reduce_fc3 = out_dim == 1

    # Row tile: multiple of 8 sublanes, capped at block_rows (VMEM-safe on v7x's
    # 64 MiB physical / 32 MiB scoped VMEM). Pad the batch to a tile multiple.
    tb = min(block_rows, _round_up(batch, 8))
    batch_p = _round_up(batch, tb)
    if batch_p != batch:
        pad = batch_p - batch
        state = jnp.pad(state, ((0, pad), (0, 0)))
        action = jnp.pad(action, ((0, pad), (0, 0)))

    grid = (pl.cdiv(batch_p, tb),)

    out = pl.pallas_call(
        _make_critic_kernel(reduce_fc3),
        out_shape=jax.ShapeDtypeStruct((batch_p, out_dim), jnp.float32),
        grid=grid,
        in_specs=[
            pl.BlockSpec((tb, state_dim), lambda i: (i, 0)),
            pl.BlockSpec((tb, action_dim), lambda i: (i, 0)),
            _const_spec(kparams["w1_s"]),
            _const_spec(kparams["w1_a"]),
            _const_spec(kparams["b1"]),
            _const_spec(kparams["w2"]),
            _const_spec(kparams["b2"]),
            _const_spec(kparams["w3"]),
            _const_spec(kparams["b3"]),
        ],
        out_specs=pl.BlockSpec((tb, out_dim), lambda i: (i, 0)),
        compiler_params=pltpu.CompilerParams(
            dimension_semantics=("parallel",)),  # shards batch tiles across TCs on v7x
    )(state, action,
      kparams["w1_s"], kparams["w1_a"], kparams["b1"],
      kparams["w2"], kparams["b2"], kparams["w3"], kparams["b3"])

    return out[:batch]


if __name__ == "__main__":
    key = jax.random.PRNGKey(0)
    k_state, k_action, k_params = jax.random.split(key, 3)

    batch = 2
    state_dim = 8
    action_dim = 4
    output_dim = 1

    state = jax.random.normal(k_state, (batch, state_dim), jnp.float32)
    action = jax.random.normal(k_action, (batch, action_dim), jnp.float32)
    raw = init_critic_params(k_params, state_dim, action_dim, output_dim)

    # Pure-JAX reference of the original (unpadded, concatenated) PyTorch math.
    x = jnp.concatenate([state, action], axis=1)
    h1 = jnp.maximum(x @ raw["w1"] + raw["b1"], 0.0)
    h2 = jnp.maximum(h1 @ raw["w2"] + raw["b2"], 0.0)
    ref = h2 @ raw["w3"] + raw["b3"]

    # f32 matmul operands: should match the reference tightly.
    kp_f32 = prepare_critic_params(raw, state_dim, compute_dtype=jnp.float32)
    q_f32 = jax.block_until_ready(critic_forward(state, action, kp_f32))
    assert q_f32.shape == (batch, output_dim)
    assert jnp.allclose(q_f32, ref, atol=1e-5, rtol=1e-5)

    # bf16 matmul operands (fast MXU path on v6e/v7x), f32 accumulation and
    # f32 element-wise work; checked with a correspondingly looser tolerance.
    kp_bf16 = prepare_critic_params(raw, state_dim, compute_dtype=jnp.bfloat16)
    q_bf16 = jax.block_until_ready(critic_forward(state, action, kp_bf16))
    assert q_bf16.shape == (batch, output_dim)
    assert jnp.allclose(q_bf16, ref, atol=5e-2, rtol=5e-2)

    print("KERNEL_OK")
</pallas_src>

<mosaic_0001>
module attributes {stable_mosaic.version = 11 : i64} {
  func.func @kernel(%arg0: i32, %arg1: memref<8x8xf32, #tpu.memory_space<vmem>>, %arg2: memref<8x4xf32, #tpu.memory_space<vmem>>, %arg3: memref<8x512xf32, #tpu.memory_space<vmem>>, %arg4: memref<4x512xf32, #tpu.memory_space<vmem>>, %arg5: memref<1x512xf32, #tpu.memory_space<vmem>>, %arg6: memref<512x384xf32, #tpu.memory_space<vmem>>, %arg7: memref<1x384xf32, #tpu.memory_space<vmem>>, %arg8: memref<1x384xf32, #tpu.memory_space<vmem>>, %arg9: memref<1x1xf32, #tpu.memory_space<vmem>>, %arg10: memref<8x1xf32, #tpu.memory_space<vmem>>) attributes {dimension_semantics = [#tpu.dimension_semantics<parallel>], iteration_bounds = array<i64: 1>, scalar_prefetch = 0 : i64, scratch_operands = 0 : i64, tpu.core_type = #tpu.core_type<tc>, window_params = [{transform_indices = @transform_0, window_bounds = array<i64: 8, 8>}, {transform_indices = @transform_1, window_bounds = array<i64: 8, 4>}, {pipeline_mode = #tpu.pipeline_mode<synchronous>, transform_indices = @transform_2, window_bounds = array<i64: 8, 512>}, {pipeline_mode = #tpu.pipeline_mode<synchronous>, transform_indices = @transform_3, window_bounds = array<i64: 4, 512>}, {pipeline_mode = #tpu.pipeline_mode<synchronous>, transform_indices = @transform_4, window_bounds = array<i64: 1, 512>}, {pipeline_mode = #tpu.pipeline_mode<synchronous>, transform_indices = @transform_5, window_bounds = array<i64: 512, 384>}, {pipeline_mode = #tpu.pipeline_mode<synchronous>, transform_indices = @transform_6, window_bounds = array<i64: 1, 384>}, {pipeline_mode = #tpu.pipeline_mode<synchronous>, transform_indices = @transform_7, window_bounds = array<i64: 1, 384>}, {pipeline_mode = #tpu.pipeline_mode<synchronous>, transform_indices = @transform_8, window_bounds = array<i64: 1, 1>}, {transform_indices = @transform_9, window_bounds = array<i64: 8, 1>}]} {
    %c0 = arith.constant 0 : index
    %c0_0 = arith.constant 0 : index
    %0 = vector.load %arg1[%c0, %c0_0] : memref<8x8xf32, #tpu.memory_space<vmem>>, vector<8x8xf32>
    %c0_1 = arith.constant 0 : index
    %c0_2 = arith.constant 0 : index
    %1 = vector.load %arg2[%c0_1, %c0_2] : memref<8x4xf32, #tpu.memory_space<vmem>>, vector<8x4xf32>
    %c0_3 = arith.constant 0 : index
    %c0_4 = arith.constant 0 : index
    %2 = vector.load %arg3[%c0_3, %c0_4] : memref<8x512xf32, #tpu.memory_space<vmem>>, vector<8x512xf32>
    %cst = arith.constant dense<0.000000e+00> : vector<8x512xf32>
    %3 = tpu.matmul %0, %2, %cst {dimension_numbers = #tpu.dot_dimension_numbers<[1], [0], [0], [1], [0, 0, 1, 1], [], []>} : vector<8x8xf32>, vector<8x512xf32>, vector<8x512xf32> -> vector<8x512xf32>
    %c0_5 = arith.constant 0 : index
    %c0_6 = arith.constant 0 : index
    %4 = vector.load %arg4[%c0_5, %c0_6] : memref<4x512xf32, #tpu.memory_space<vmem>>, vector<4x512xf32>
    %cst_7 = arith.constant dense<0.000000e+00> : vector<8x512xf32>
    %5 = tpu.matmul %1, %4, %cst_7 {dimension_numbers = #tpu.dot_dimension_numbers<[1], [0], [0], [1], [0, 0, 1, 1], [], []>} : vector<8x4xf32>, vector<4x512xf32>, vector<8x512xf32> -> vector<8x512xf32>
    %6 = arith.addf %3, %5 : vector<8x512xf32>
    %c0_8 = arith.constant 0 : index
    %c0_9 = arith.constant 0 : index
    %7 = vector.load %arg5[%c0_8, %c0_9] : memref<1x512xf32, #tpu.memory_space<vmem>>, vector<1x512xf32>
    %8 = vector.broadcast %7 : vector<1x512xf32> to vector<8x512xf32>
    %9 = arith.addf %6, %8 : vector<8x512xf32>
    %cst_10 = arith.constant 0.000000e+00 : f32
    %10 = vector.broadcast %cst_10 : f32 to vector<8x512xf32>
    %11 = arith.maximumf %9, %10 : vector<8x512xf32>
    %c0_11 = arith.constant 0 : index
    %c0_12 = arith.constant 0 : index
    %12 = vector.load %arg6[%c0_11, %c0_12] : memref<512x384xf32, #tpu.memory_space<vmem>>, vector<512x384xf32>
    %cst_13 = arith.constant dense<0.000000e+00> : vector<8x384xf32>
    %13 = tpu.matmul %11, %12, %cst_13 {dimension_numbers = #tpu.dot_dimension_numbers<[1], [0], [0], [1], [0, 0, 1, 1], [], []>} : vector<8x512xf32>, vector<512x384xf32>, vector<8x384xf32> -> vector<8x384xf32>
    %c0_14 = arith.constant 0 : index
    %c0_15 = arith.constant 0 : index
    %14 = vector.load %arg7[%c0_14, %c0_15] : memref<1x384xf32, #tpu.memory_space<vmem>>, vector<1x384xf32>
    %15 = vector.broadcast %14 : vector<1x384xf32> to vector<8x384xf32>
    %16 = arith.addf %13, %15 : vector<8x384xf32>
    %cst_16 = arith.constant 0.000000e+00 : f32
    %17 = vector.broadcast %cst_16 : f32 to vector<8x384xf32>
    %18 = arith.maximumf %16, %17 : vector<8x384xf32>
    %c0_17 = arith.constant 0 : index
    %c0_18 = arith.constant 0 : index
    %19 = vector.load %arg8[%c0_17, %c0_18] : memref<1x384xf32, #tpu.memory_space<vmem>>, vector<1x384xf32>
    %20 = vector.broadcast %19 : vector<1x384xf32> to vector<8x384xf32>
    %21 = arith.mulf %18, %20 : vector<8x384xf32>
    %cst_19 = arith.constant dense<0.000000e+00> : vector<8xf32>
    %22 = vector.multi_reduction <add>, %21, %cst_19 [1] : vector<8x384xf32> to vector<8xf32>
    %23 = vector.shape_cast %22 : vector<8xf32> to vector<8x1xf32>
    %c0_20 = arith.constant 0 : index
    %c0_21 = arith.constant 0 : index
    %24 = vector.load %arg9[%c0_20, %c0_21] : memref<1x1xf32, #tpu.memory_space<vmem>>, vector<1x1xf32>
    %25 = vector.broadcast %24 : vector<1x1xf32> to vector<8x1xf32>
    %26 = arith.addf %23, %25 : vector<8x1xf32>
    %c0_22 = arith.constant 0 : index
    %c0_23 = arith.constant 0 : index
    %27 = vector.load %arg10[%c0_22, %c0_23] : memref<8x1xf32, #tpu.memory_space<vmem>>, vector<8x1xf32>
    tpu.vector_store %arg10[%c0_22, %c0_23], %26 {strides = array<i32>} : memref<8x1xf32, #tpu.memory_space<vmem>>, vector<8x1xf32>,
    return
  }
  func.func @transform_0(%arg0: i32) -> (i32, i32) {
    %c0_i32 = arith.constant 0 : i32
    %c0_i32_0 = arith.constant 0 : i32
    return %arg0, %c0_i32 : i32, i32
  }
  func.func @transform_1(%arg0: i32) -> (i32, i32) {
    %c0_i32 = arith.constant 0 : i32
    %c0_i32_0 = arith.constant 0 : i32
    return %arg0, %c0_i32 : i32, i32
  }
  func.func @transform_2(%arg0: i32) -> (i32, i32) {
    %c0_i32 = arith.constant 0 : i32
    %c0_i32_0 = arith.constant 0 : i32
    %c0_i32_1 = arith.constant 0 : i32
    return %c0_i32, %c0_i32_0 : i32, i32
  }
  func.func @transform_3(%arg0: i32) -> (i32, i32) {
    %c0_i32 = arith.constant 0 : i32
    %c0_i32_0 = arith.constant 0 : i32
    %c0_i32_1 = arith.constant 0 : i32
    return %c0_i32, %c0_i32_0 : i32, i32
  }
  func.func @transform_4(%arg0: i32) -> (i32, i32) {
    %c0_i32 = arith.constant 0 : i32
    %c0_i32_0 = arith.constant 0 : i32
    %c0_i32_1 = arith.constant 0 : i32
    return %c0_i32, %c0_i32_0 : i32, i32
  }
  func.func @transform_5(%arg0: i32) -> (i32, i32) {
    %c0_i32 = arith.constant 0 : i32
    %c0_i32_0 = arith.constant 0 : i32
    %c0_i32_1 = arith.constant 0 : i32
    return %c0_i32, %c0_i32_0 : i32, i32
  }
  func.func @transform_6(%arg0: i32) -> (i32, i32) {
    %c0_i32 = arith.constant 0 : i32
    %c0_i32_0 = arith.constant 0 : i32
    %c0_i32_1 = arith.constant 0 : i32
    return %c0_i32, %c0_i32_0 : i32, i32
  }
  func.func @transform_7(%arg0: i32) -> (i32, i32) {
    %c0_i32 = arith.constant 0 : i32
    %c0_i32_0 = arith.constant 0 : i32
    %c0_i32_1 = arith.constant 0 : i32
    return %c0_i32, %c0_i32_0 : i32, i32
  }
  func.func @transform_8(%arg0: i32) -> (i32, i32) {
    %c0_i32 = arith.constant 0 : i32
    %c0_i32_0 = arith.constant 0 : i32
    %c0_i32_1 = arith.constant 0 : i32
    return %c0_i32, %c0_i32_0 : i32, i32
  }
  func.func @transform_9(%arg0: i32) -> (i32, i32) {
    %c0_i32 = arith.constant 0 : i32
    %c0_i32_0 = arith.constant 0 : i32
    return %arg0, %c0_i32 : i32, i32
  }
}

</mosaic_0001>

<llo_original>
// kernel: critic_forward.1
$region0: #{critic_forward.1}
  #allocation0 [shape = 'u32[]', space=smem, size = 0x4, offset = 0x4, fixed_abs, tag = 'smem constant byte address 0x4 - core index']
  #allocation1 [shape = 'u32[144,128]{1,0:T(1,128)}', space=vmem, size = 0x12000, scoped, tag = 'internal scratch']
  #allocation2 [shape = 'f32[1,1]{1,0:T(1,128)S(1)}', space=vmem, size = 0x200, scoped, tag = 'scoped memory for critic_forward.1']
  %s0 = inlined_call_operand.vmem [shape: f32[8,8], index: 0, kind: input, shape index: {}]
  %s1 = inlined_call_operand.vmem [shape: f32[8,4], index: 1, kind: input, shape index: {}]
  %s2 = inlined_call_operand.vmem [shape: f32[8,512], index: 2, kind: input, shape index: {}]
  %s3 = inlined_call_operand.hbm [shape: f32[4,512], index: 3, kind: input, shape index: {}]
  %s4 = inlined_call_operand.hbm [shape: f32[1,512], index: 4, kind: input, shape index: {}]
  %s5 = inlined_call_operand.hbm [shape: f32[512,384], index: 5, kind: input, shape index: {}]
  %s6 = inlined_call_operand.hbm [shape: f32[1,384], index: 6, kind: input, shape index: {}]
  %s7 = inlined_call_operand.vmem [shape: f32[1,384], index: 7, kind: input, shape index: {}]
  %s8 = inlined_call_operand.<no memory space> [shape: f32[1,1], index: 8, kind: input, shape index: {}]
  %s9 = inlined_call_operand.vmem [shape: f32[8,1], index: 9, kind: output, shape index: {}]
  %s10 = sld [smem:[#allocation0]]
  $region62: #{critic_forward.1} parent=0
    _
  %s12 = ssub.s32 1, %s10
  %s13 = scalar_select 0, %s12, %s10
  %v14 = vstv %s8
  %15 = vst [vmem:[#allocation2] sm:$0x1] %v14
  $region1: #{critic_forward.1} parent=0
    #allocation3 [shape = 'u8[8192]{0}', space=vmem, size = 0x2000, scoped, tag = 'input window, operand 3, single buffered']
    #allocation4 [shape = 's32[1]{0}', space=sflag, size = 0x4, scoped, tag = 'scoped memory for critic_forward.1']
    #allocation5 [shape = 'u8[2048]{0}', space=vmem, size = 0x800, scoped, tag = 'input window, operand 4, single buffered']
    #allocation6 [shape = 's32[1]{0}', space=sflag, size = 0x4, scoped, tag = 'scoped memory for critic_forward.1']
    #allocation7 [shape = 'u8[786432]{0}', space=vmem, size = 0xc0000, scoped, tag = 'input window, operand 5, single buffered']
    #allocation8 [shape = 'u8[1536]{0}', space=vmem, size = 0x800, scoped, tag = 'input window, operand 6, single buffered']
    #allocation9 [shape = 's32[1]{0}', space=sflag, size = 0x4, scoped, tag = 'scoped memory for critic_forward.1']
    %16 = vsyncpa [#allocation4], 0
    %17 = vsyncpa [#allocation6], 0
    %18 = vsyncpa [#allocation9], 0
    // Predicated region
    $region2: #{critic_forward.1} parent=1 // pred_check
      _
    $region3: #{critic_forward.1} parent=1 // pred_check_branch
      %20 = sbr.rel (0) target = $region5
    $region4: #{critic_forward.1} parent=1 // pred_region
      _
    $region5: #{critic_forward.1} parent=1 // pred_fallthru
      _
    // Predicated region
    $region6: #{critic_forward.1} parent=1 // pred_check
      _
    $region7: #{critic_forward.1} parent=1 // pred_check_branch
      %22 = sbr.rel (0) target = $region9
    $region8: #{critic_forward.1} parent=1 // pred_region
      _
    $region9: #{critic_forward.1} parent=1 // pred_fallthru
      _
    // Predicated region
    $region10: #{critic_forward.1} parent=1 // pred_check
      _
    $region11: #{critic_forward.1} parent=1 // pred_check_branch
      %24 = sbr.rel (0) target = $region13
    $region12: #{critic_forward.1} parent=1 // pred_region
      _
    $region13: #{critic_forward.1} parent=1 // pred_fallthru
      _
    // Predicated region
    $region14: #{critic_forward.1} parent=1 // pred_check
      _
    $region15: #{critic_forward.1} parent=1 // pred_check_branch
      %26 = sbr.rel (0) target = $region17
    $region16: #{critic_forward.1} parent=1 // pred_region
      %s28 = ssub.s32 256, 256
      %29 = vsyncadd [#allocation4], %s28
      %s31 = sshll.u32 [#allocation3], 4
      %s32 = int_to_ptr.vmem [resolvable:$true] %s31
      %34 = dma.hbm_to_vmem [thread:$0]  %s3, 256, %s32, [#allocation4]
    $region17: #{critic_forward.1} parent=1 // pred_fallthru
      _
    // Predicated region
    $region18: #{critic_forward.1} parent=1 // pred_check
      _
    $region19: #{critic_forward.1} parent=1 // pred_check_branch
      %36 = sbr.rel (0) target = $region21
    $region20: #{critic_forward.1} parent=1 // pred_region
      %s38 = ssub.s32 64, 64
      %39 = vsyncadd [#allocation6], %s38
      %s41 = sshll.u32 [#allocation5], 4
      %s42 = int_to_ptr.vmem [resolvable:$true] %s41
      %44 = dma.hbm_to_vmem [thread:$0]  %s4, 64, %s42, [#allocation6]
    $region21: #{critic_forward.1} parent=1 // pred_fallthru
      _
    // Predicated region
    $region22: #{critic_forward.1} parent=1 // pred_check
      _
    $region23: #{critic_forward.1} parent=1 // pred_check_branch
      %46 = sbr.rel (0) target = $region25
    $region24: #{critic_forward.1} parent=1 // pred_region
      %s48 = ssub.s32 24576, 24576
      %49 = vsyncadd [#allocation6], %s48
      %s50 = sshll.u32 [#allocation7], 4
      %s51 = int_to_ptr.vmem [resolvable:$true] %s50
      %56 = dma.hbm_to_vmem [thread:$0]  %s5, 24576, %s51, [#allocation6], 384, 384, 24
    $region25: #{critic_forward.1} parent=1 // pred_fallthru
      _
    // Predicated region
    $region26: #{critic_forward.1} parent=1 // pred_check
      _
    $region27: #{critic_forward.1} parent=1 // pred_check_branch
      %58 = sbr.rel (0) target = $region29
    $region28: #{critic_forward.1} parent=1 // pred_region
      %s60 = ssub.s32 48, 48
      %61 = vsyncadd [#allocation9], %s60
      %s63 = sshll.u32 [#allocation8], 4
      %s64 = int_to_ptr.vmem [resolvable:$true] %s63
      %66 = dma.hbm_to_vmem [thread:$0]  %s6, 48, %s64, [#allocation9]
    $region29: #{critic_forward.1} parent=1 // pred_fallthru
      _
    // Predicated region
    $region30: #{critic_forward.1} parent=1 // pred_check
      _
    $region31: #{critic_forward.1} parent=1 // pred_check_branch
      %68 = sbr.rel (0) target = $region33
    $region32: #{critic_forward.1} parent=1 // pred_region
      _
    $region33: #{critic_forward.1} parent=1 // pred_fallthru
      _
    // Predicated region
    $region34: #{critic_forward.1} parent=1 // pred_check
      _
    $region35: #{critic_forward.1} parent=1 // pred_check_branch
      %70 = sbr.rel (0) target = $region37
    $region36: #{critic_forward.1} parent=1 // pred_region
      _
    $region37: #{critic_forward.1} parent=1 // pred_fallthru
      _
    // Predicated region
    $region38: #{critic_forward.1} parent=1 // pred_check
      _
    $region39: #{critic_forward.1} parent=1 // pred_check_branch
      %72 = sbr.rel (0) target = $region41
    $region40: #{critic_forward.1} parent=1 // pred_region
      %73 = dma.done [#allocation4], 256
    $region41: #{critic_forward.1} parent=1 // pred_fallthru
      _
    // Predicated region
    $region42: #{critic_forward.1} parent=1 // pred_check
      _
    $region43: #{critic_forward.1} parent=1 // pred_check_branch
      %75 = sbr.rel (0) target = $region45
    $region44: #{critic_forward.1} parent=1 // pred_region
      %76 = dma.done [#allocation6], 64
    $region45: #{critic_forward.1} parent=1 // pred_fallthru
      _
    // Predicated region
    $region46: #{critic_forward.1} parent=1 // pred_check
      _
    $region47: #{critic_forward.1} parent=1 // pred_check_branch
      %78 = sbr.rel (0) target = $region49
    $region48: #{critic_forward.1} parent=1 // pred_region
      %79 = dma.done [#allocation6], 24576
    $region49: #{critic_forward.1} parent=1 // pred_fallthru
      _
    // Predicated region
    $region50: #{critic_forward.1} parent=1 // pred_check
      _
    $region51: #{critic_forward.1} parent=1 // pred_check_branch
      %81 = sbr.rel (0) target = $region53
    $region52: #{critic_forward.1} parent=1 // pred_region
      %82 = dma.done [#allocation9], 48
    $region53: #{critic_forward.1} parent=1 // pred_fallthru
      _
    %v83 = vld [vmem:[%s0] sm:$0xff]
    %v84 = vld [vmem:[%s1] sm:$0xff]
    %v85 = vld [vmem:[%s2] sm:$0xff]
    %v86 = vld [vmem:[%s2 + $0x8] sm:$0xff]
    %v87 = vld [vmem:[%s2 + $0x10] sm:$0xff]
    %v88 = vld [vmem:[%s2 + $0x18] sm:$0xff]
    %v89 = vld [vmem:[#allocation3] sm:$0xff]
    %v90 = vld [vmem:[#allocation3 + $0x8] sm:$0xff]
    %v93 = vcombine.high %v89, %v89
    %v94 = vcombine.high %v90, %v90
    %vm95 = vcmask 31744
    %v97 = vsel %vm95, %v84, 0
    %vm99 = vcmask 1043456
    %v100 = vsel %vm99, %v89, 0
    %v102 = vsel %vm99, %v93, 0
    %v104 = vsel %vm99, %v90, 0
    %v106 = vsel %vm99, %v94, 0
    %108 = vmatprep.subr.mxu0 0.0
    %109 = vmatpush1.msra.mxu0 0.0
    %110 = vmatprep.subr.mxu0 0.0
    %111 = vmatpush1.msra.mxu0 0.0
    %112 = vmatprep.subr.mxu0 0.0
    %113 = vmatpush1.msra.mxu0 0.0
    %114 = vmatprep.subr.mxu0 0.0
    %115 = vmatpush1.msra.mxu0 0.0
    %116 = vmatprep.subr.mxu0 0.0
    %117 = vmatpush1.msra.mxu0 0.0
    %118 = vmatprep.subr.mxu0 0.0
    %119 = vmatpush1.msra.mxu0 0.0
    %120 = vmatprep.subr.mxu0 0.0
    %121 = vmatpush1.msra.mxu0 0.0
    %122 = vmatprep.subr.mxu0 0.0
    %123 = vmatpush1.msra.mxu0 0.0
    %124 = vmatprep.subr.mxu0 0.0
    %125 = vmatpush1.msra.mxu0 0.0
    %126 = vmatprep.subr.mxu0 0.0
    %127 = vmatpush1.msra.mxu0 0.0
    %128 = vmatprep.subr.mxu0 0.0
    %129 = vmatpush1.msra.mxu0 0.0
    %130 = vmatprep.subr.mxu0 0.0
    %131 = vmatpush1.msra.mxu0 0.0
    %132 = vmatprep.subr.mxu0 0.0
    %133 = vmatpush1.msra.mxu0 0.0
    %134 = vmatprep.subr.mxu0 0.0
    %135 = vmatpush1.msra.mxu0 0.0
    %136 = vmatprep.subr.mxu0 0.0
    %137 = vmatpush1.msra.mxu0 0.0
    %138 = vmatprep.subr.mxu0 %v102
    %139 = vmatpush1.msra.mxu0 %v100
    %140 = vmatprep.subr.mxu0 0.0
    %141 = vmatpush2.msra.mxu0 0.0
    %142 = vmatprep.subr.mxu0 0.0
    %143 = vmatpush2.msra.mxu0 0.0
    %144 = vmatprep.subr.mxu0 0.0
    %145 = vmatpush2.msra.mxu0 0.0
    %146 = vmatprep.subr.mxu0 0.0
    %147 = vmatpush2.msra.mxu0 0.0
    %148 = vmatprep.subr.mxu0 0.0
    %149 = vmatpush2.msra.mxu0 0.0
    %150 = vmatprep.subr.mxu0 0.0
    %151 = vmatpush2.msra.mxu0 0.0
    %152 = vmatprep.subr.mxu0 0.0
    %153 = vmatpush2.msra.mxu0 0.0
    %154 = vmatprep.subr.mxu0 0.0
    %155 = vmatpush2.msra.mxu0 0.0
    %156 = vmatprep.subr.mxu0 0.0
    %157 = vmatpush2.msra.mxu0 0.0
    %158 = vmatprep.subr.mxu0 0.0
    %159 = vmatpush2.msra.mxu0 0.0
    %160 = vmatprep.subr.mxu0 0.0
    %161 = vmatpush2.msra.mxu0 0.0
    %162 = vmatprep.subr.mxu0 0.0
    %163 = vmatpush2.msra.mxu0 0.0
    %164 = vmatprep.subr.mxu0 0.0
    %165 = vmatpush2.msra.mxu0 0.0
    %166 = vmatprep.subr.mxu0 0.0
    %167 = vmatpush2.msra.mxu0 0.0
    %168 = vmatprep.subr.mxu0 0.0
    %169 = vmatpush2.msra.mxu0 0.0
    %170 = vmatprep.subr.mxu0 0.0
    %171 = vmatpush2.msra.mxu0 0.0
    %172 = vmatprep.mubr.f32.mxu0 0.0
    %173 = vmatmul.mubr.f32.gmra.mxu0 %v97
    %v174 = vpop.f32.mrf.mxu0
    %v175 = vadd.f32 0.0, %v174
    %v176 = vpop.f32.mrf.mxu0
    %v177 = vadd.f32 0.0, %v176
    %178 = vdwg.mxu0
    %179 = vmatprep.subr.mxu0 0.0
    %180 = vmatpush1.msra.mxu0 0.0
    %181 = vmatprep.subr.mxu0 0.0
    %182 = vmatpush1.msra.mxu0 0.0
    %183 = vmatprep.subr.mxu0 0.0
    %184 = vmatpush1.msra.mxu0 0.0
    %185 = vmatprep.subr.mxu0 0.0
    %186 = vmatpush1.msra.mxu0 0.0
    %187 = vmatprep.subr.mxu0 0.0
    %188 = vmatpush1.msra.mxu0 0.0
    %189 = vmatprep.subr.mxu0 0.0
    %190 = vmatpush1.msra.mxu0 0.0
    %191 = vmatprep.subr.mxu0 0.0
    %192 = vmatpush1.msra.mxu0 0.0
    %193 = vmatprep.subr.mxu0 0.0
    %194 = vmatpush1.msra.mxu0 0.0
    %195 = vmatprep.subr.mxu0 0.0
    %196 = vmatpush1.msra.mxu0 0.0
    %197 = vmatprep.subr.mxu0 0.0
    %198 = vmatpush1.msra.mxu0 0.0
    %199 = vmatprep.subr.mxu0 0.0
    %200 = vmatpush1.msra.mxu0 0.0
    %201 = vmatprep.subr.mxu0 0.0
    %202 = vmatpush1.msra.mxu0 0.0
    %203 = vmatprep.subr.mxu0 0.0
    %204 = vmatpush1.msra.mxu0 0.0
    %205 = vmatprep.subr.mxu0 0.0
    %206 = vmatpush1.msra.mxu0 0.0
    %207 = vmatprep.subr.mxu0 0.0
    %208 = vmatpush1.msra.mxu0 0.0
    %209 = vmatprep.subr.mxu0 %v106
    %210 = vmatpush1.msra.mxu0 %v104
    %211 = vmatprep.subr.mxu0 0.0
    %212 = vmatpush2.msra.mxu0 0.0
    %213 = vmatprep.subr.mxu0 0.0
    %214 = vmatpush2.msra.mxu0 0.0
    %215 = vmatprep.subr.mxu0 0.0
    %216 = vmatpush2.msra.mxu0 0.0
    %217 = vmatprep.subr.mxu0 0.0
    %218 = vmatpush2.msra.mxu0 0.0
    %219 = vmatprep.subr.mxu0 0.0
    %220 = vmatpush2.msra.mxu0 0.0
    %221 = vmatprep.subr.mxu0 0.0
    %222 = vmatpush2.msra.mxu0 0.0
    %223 = vmatprep.subr.mxu0 0.0
    %224 = vmatpush2.msra.mxu0 0.0
    %225 = vmatprep.subr.mxu0 0.0
    %226 = vmatpush2.msra.mxu0 0.0
    %227 = vmatprep.subr.mxu0 0.0
    %228 = vmatpush2.msra.mxu0 0.0
    %229 = vmatprep.subr.mxu0 0.0
    %230 = vmatpush2.msra.mxu0 0.0
    %231 = vmatprep.subr.mxu0 0.0
    %232 = vmatpush2.msra.mxu0 0.0
    %233 = vmatprep.subr.mxu0 0.0
    %234 = vmatpush2.msra.mxu0 0.0
    %235 = vmatprep.subr.mxu0 0.0
    %236 = vmatpush2.msra.mxu0 0.0
    %237 = vmatprep.subr.mxu0 0.0
    %238 = vmatpush2.msra.mxu0 0.0
    %239 = vmatprep.subr.mxu0 0.0
    %240 = vmatpush2.msra.mxu0 0.0
    %241 = vmatprep.subr.mxu0 0.0
    %242 = vmatpush2.msra.mxu0 0.0
    %243 = vmatprep.mubr.f32.mxu0 0.0
    %244 = vmatmul.mubr.f32.gmra.mxu0 %v97
    %v245 = vpop.f32.mrf.mxu0
    %v246 = vadd.f32 0.0, %v245
    %v247 = vpop.f32.mrf.mxu0
    %v248 = vadd.f32 0.0, %v247
    %249 = vdwg.mxu0
    %vm250 = vcmask 64512
    %v252 = vsel %vm250, %v83, 0
    %254 = vmatprep.subr.mxu0 0.0
    %255 = vmatpush1.msra.mxu0 0.0
    %256 = vmatprep.subr.mxu0 0.0
    %257 = vmatpush1.msra.mxu0 0.0
    %258 = vmatprep.subr.mxu0 0.0
    %259 = vmatpush1.msra.mxu0 0.0
    %260 = vmatprep.subr.mxu0 0.0
    %261 = vmatpush1.msra.mxu0 0.0
    %262 = vmatprep.subr.mxu0 0.0
    %263 = vmatpush1.msra.mxu0 0.0
    %264 = vmatprep.subr.mxu0 0.0
    %265 = vmatpush1.msra.mxu0 0.0
    %266 = vmatprep.subr.mxu0 0.0
    %267 = vmatpush1.msra.mxu0 0.0
    %268 = vmatprep.subr.mxu0 0.0
    %269 = vmatpush1.msra.mxu0 0.0
    %270 = vmatprep.subr.mxu0 0.0
    %271 = vmatpush1.msra.mxu0 0.0
    %272 = vmatprep.subr.mxu0 0.0
    %273 = vmatpush1.msra.mxu0 0.0
    %274 = vmatprep.subr.mxu0 0.0
    %275 = vmatpush1.msra.mxu0 0.0
    %276 = vmatprep.subr.mxu0 0.0
    %277 = vmatpush1.msra.mxu0 0.0
    %278 = vmatprep.subr.mxu0 0.0
    %279 = vmatpush1.msra.mxu0 0.0
    %280 = vmatprep.subr.mxu0 0.0
    %281 = vmatpush1.msra.mxu0 0.0
    %282 = vmatprep.subr.mxu0 0.0
    %283 = vmatpush1.msra.mxu0 0.0
    %284 = vmatprep.subr.mxu0 %v86
    %285 = vmatpush1.msra.mxu0 %v85
    %286 = vmatprep.subr.mxu0 0.0
    %287 = vmatpush2.msra.mxu0 0.0
    %288 = vmatprep.subr.mxu0 0.0
    %289 = vmatpush2.msra.mxu0 0.0
    %290 = vmatprep.subr.mxu0 0.0
    %291 = vmatpush2.msra.mxu0 0.0
    %292 = vmatprep.subr.mxu0 0.0
    %293 = vmatpush2.msra.mxu0 0.0
    %294 = vmatprep.subr.mxu0 0.0
    %295 = vmatpush2.msra.mxu0 0.0
    %296 = vmatprep.subr.mxu0 0.0
    %297 = vmatpush2.msra.mxu0 0.0
    %298 = vmatprep.subr.mxu0 0.0
    %299 = vmatpush2.msra.mxu0 0.0
    %300 = vmatprep.subr.mxu0 0.0
    %301 = vmatpush2.msra.mxu0 0.0
    %302 = vmatprep.subr.mxu0 0.0
    %303 = vmatpush2.msra.mxu0 0.0
    %304 = vmatprep.subr.mxu0 0.0
    %305 = vmatpush2.msra.mxu0 0.0
    %306 = vmatprep.subr.mxu0 0.0
    %307 = vmatpush2.msra.mxu0 0.0
    %308 = vmatprep.subr.mxu0 0.0
    %309 = vmatpush2.msra.mxu0 0.0
    %310 = vmatprep.subr.mxu0 0.0
    %311 = vmatpush2.msra.mxu0 0.0
    %312 = vmatprep.subr.mxu0 0.0
    %313 = vmatpush2.msra.mxu0 0.0
    %314 = vmatprep.subr.mxu0 0.0
    %315 = vmatpush2.msra.mxu0 0.0
    %316 = vmatprep.subr.mxu0 0.0
    %317 = vmatpush2.msra.mxu0 0.0
    %318 = vmatprep.mubr.f32.mxu0 0.0
    %319 = vmatmul.mubr.f32.gmra.mxu0 %v252
    %v320 = vpop.f32.mrf.mxu0
    %v321 = vadd.f32 %v175, %v320
    %v322 = vpop.f32.mrf.mxu0
    %v323 = vadd.f32 %v177, %v322
    %324 = vdwg.mxu0
    %325 = vmatprep.subr.mxu0 0.0
    %326 = vmatpush1.msra.mxu0 0.0
    %327 = vmatprep.subr.mxu0 0.0
    %328 = vmatpush1.msra.mxu0 0.0
    %329 = vmatprep.subr.mxu0 0.0
    %330 = vmatpush1.msra.mxu0 0.0
    %331 = vmatprep.subr.mxu0 0.0
    %332 = vmatpush1.msra.mxu0 0.0
    %333 = vmatprep.subr.mxu0 0.0
    %334 = vmatpush1.msra.mxu0 0.0
    %335 = vmatprep.subr.mxu0 0.0
    %336 = vmatpush1.msra.mxu0 0.0
    %337 = vmatprep.subr.mxu0 0.0
    %338 = vmatpush1.msra.mxu0 0.0
    %339 = vmatprep.subr.mxu0 0.0
    %340 = vmatpush1.msra.mxu0 0.0
    %341 = vmatprep.subr.mxu0 0.0
    %342 = vmatpush1.msra.mxu0 0.0
    %343 = vmatprep.subr.mxu0 0.0
    %344 = vmatpush1.msra.mxu0 0.0
    %345 = vmatprep.subr.mxu0 0.0
    %346 = vmatpush1.msra.mxu0 0.0
    %347 = vmatprep.subr.mxu0 0.0
    %348 = vmatpush1.msra.mxu0 0.0
    %349 = vmatprep.subr.mxu0 0.0
    %350 = vmatpush1.msra.mxu0 0.0
    %351 = vmatprep.subr.mxu0 0.0
    %352 = vmatpush1.msra.mxu0 0.0
    %353 = vmatprep.subr.mxu0 0.0
    %354 = vmatpush1.msra.mxu0 0.0
    %355 = vmatprep.subr.mxu0 %v88
    %356 = vmatpush1.msra.mxu0 %v87
    %357 = vmatprep.subr.mxu0 0.0
    %358 = vmatpush2.msra.mxu0 0.0
    %359 = vmatprep.subr.mxu0 0.0
    %360 = vmatpush2.msra.mxu0 0.0
    %361 = vmatprep.subr.mxu0 0.0
    %362 = vmatpush2.msra.mxu0 0.0
    %363 = vmatprep.subr.mxu0 0.0
    %364 = vmatpush2.msra.mxu0 0.0
    %365 = vmatprep.subr.mxu0 0.0
    %366 = vmatpush2.msra.mxu0 0.0
    %367 = vmatprep.subr.mxu0 0.0
    %368 = vmatpush2.msra.mxu0 0.0
    %369 = vmatprep.subr.mxu0 0.0
    %370 = vmatpush2.msra.mxu0 0.0
    %371 = vmatprep.subr.mxu0 0.0
    %372 = vmatpush2.msra.mxu0 0.0
    %373 = vmatprep.subr.mxu0 0.0
    %374 = vmatpush2.msra.mxu0 0.0
    %375 = vmatprep.subr.mxu0 0.0
    %376 = vmatpush2.msra.mxu0 0.0
    %377 = vmatprep.subr.mxu0 0.0
    %378 = vmatpush2.msra.mxu0 0.0
    %379 = vmatprep.subr.mxu0 0.0
    %380 = vmatpush2.msra.mxu0 0.0
    %381 = vmatprep.subr.mxu0 0.0
    %382 = vmatpush2.msra.mxu0 0.0
    %383 = vmatprep.subr.mxu0 0.0
    %384 = vmatpush2.msra.mxu0 0.0
    %385 = vmatprep.subr.mxu0 0.0
    %386 = vmatpush2.msra.mxu0 0.0
    %387 = vmatprep.subr.mxu0 0.0
    %388 = vmatpush2.msra.mxu0 0.0
    %389 = vmatprep.mubr.f32.mxu0 0.0
    %390 = vmatmul.mubr.f32.gmra.mxu0 %v252
    %v391 = vpop.f32.mrf.mxu0
    %v392 = vadd.f32 %v246, %v391
    %v393 = vpop.f32.mrf.mxu0
    %v394 = vadd.f32 %v248, %v393
    %395 = vdwg.mxu0
    %v396 = vld [vmem:[#allocation5] sm:$0xf]
    %v398 = vlaneseq
    %v399 = vshrl.u32 %v398, 7
    %v400 = vsub.s32 0, %v399
    %v401 = vrot.slane %v396, %v400
    %v402 = vlaneseq
    %v403 = vshrl.u32 %v402, 7
    %v404 = vsub.s32 1, %v403
    %v405 = vrot.slane %v396, %v404
    %v406 = vlaneseq
    %v407 = vshrl.u32 %v406, 7
    %v408 = vsub.s32 2, %v407
    %v409 = vrot.slane %v396, %v408
    %v410 = vlaneseq
    %v411 = vshrl.u32 %v410, 7
    %v412 = vsub.s32 3, %v411
    %v413 = vrot.slane %v396, %v412
    %v418 = vadd.f32 %v321, %v401
    %v419 = vadd.f32 %v323, %v405
    %v420 = vadd.f32 %v392, %v409
    %v421 = vadd.f32 %v394, %v413
    %v422 = vmax.f32 %v418, 0.0
    %v423 = vmax.f32 %v419, 0.0
    %v424 = vmax.f32 %v420, 0.0
    %v425 = vmax.f32 %v421, 0.0
    %v426 = vld [vmem:[#allocation7] sm:$0xff]
    %v427 = vld [vmem:[#allocation7 + $0x8] sm:$0xff]
    %v428 = vld [vmem:[#allocation7 + $0x10] sm:$0xff]
    %v429 = vld [vmem:[#allocation7 + $0x18] sm:$0xff]
    %v430 = vld [vmem:[#allocation7 + $0x20] sm:$0xff]
    %v431 = vld [vmem:[#allocation7 + $0x28] sm:$0xff]
    %v432 = vld [vmem:[#allocation7 + $0x30] sm:$0xff]
    %v433 = vld [vmem:[#allocation7 + $0x38] sm:$0xff]
    %v434 = vld [vmem:[#allocation7 + $0x40] sm:$0xff]
    %v435 = vld [vmem:[#allocation7 + $0x48] sm:$0xff]
    %v436 = vld [vmem:[#allocation7 + $0x50] sm:$0xff]
    %v437 = vld [vmem:[#allocation7 + $0x58] sm:$0xff]
    %v438 = vld [vmem:[#allocation7 + $0x60] sm:$0xff]
    %v439 = vld [vmem:[#allocation7 + $0x68] sm:$0xff]
    %v440 = vld [vmem:[#allocation7 + $0x70] sm:$0xff]
    %v441 = vld [vmem:[#allocation7 + $0x78] sm:$0xff]
    %v442 = vld [vmem:[#allocation7 + $0x80] sm:$0xff]
    %v443 = vld [vmem:[#allocation7 + $0x88] sm:$0xff]
    %v444 = vld [vmem:[#allocation7 + $0x90] sm:$0xff]
    %v445 = vld [vmem:[#allocation7 + $0x98] sm:$0xff]
    %v446 = vld [vmem:[#allocation7 + $0xa0] sm:$0xff]
    %v447 = vld [vmem:[#allocation7 + $0xa8] sm:$0xff]
    %v448 = vld [vmem:[#allocation7 + $0xb0] sm:$0xff]
    %v449 = vld [vmem:[#allocation7 + $0xb8] sm:$0xff]
    %v450 = vld [vmem:[#allocation7 + $0xc0] sm:$0xff]
    %v451 = vld [vmem:[#allocation7 + $0xc8] sm:$0xff]
    %v452 = vld [vmem:[#allocation7 + $0xd0] sm:$0xff]
    %v453 = vld [vmem:[#allocation7 + $0xd8] sm:$0xff]
    %v454 = vld [vmem:[#allocation7 + $0xe0] sm:$0xff]
    %v455 = vld [vmem:[#allocation7 + $0xe8] sm:$0xff]
    %v456 = vld [vmem:[#allocation7 + $0xf0] sm:$0xff]
    %v457 = vld [vmem:[#allocation7 + $0xf8] sm:$0xff]
    %v458 = vld [vmem:[#allocation7 + $0x100] sm:$0xff]
    %v459 = vld [vmem:[#allocation7 + $0x108] sm:$0xff]
    %v460 = vld [vmem:[#allocation7 + $0x110] sm:$0xff]
    %v461 = vld [vmem:[#allocation7 + $0x118] sm:$0xff]
    %v462 = vld [vmem:[#allocation7 + $0x120] sm:$0xff]
    %v463 = vld [vmem:[#allocation7 + $0x128] sm:$0xff]
    %v464 = vld [vmem:[#allocation7 + $0x130] sm:$0xff]
    %v465 = vld [vmem:[#allocation7 + $0x138] sm:$0xff]
    %v466 = vld [vmem:[#allocation7 + $0x140] sm:$0xff]
    %v467 = vld [vmem:[#allocation7 + $0x148] sm:$0xff]
    %v468 = vld [vmem:[#allocation7 + $0x150] sm:$0xff]
    %v469 = vld [vmem:[#allocation7 + $0x158] sm:$0xff]
    %v470 = vld [vmem:[#allocation7 + $0x160] sm:$0xff]
    %v471 = vld [vmem:[#allocation7 + $0x168] sm:$0xff]
    %v472 = vld [vmem:[#allocation7 + $0x170] sm:$0xff]
    %v473 = vld [vmem:[#allocation7 + $0x178] sm:$0xff]
    %v474 = vld [vmem:[#allocation7 + $0x180] sm:$0xff]
    %v475 = vld [vmem:[#allocation7 + $0x188] sm:$0xff]
    %v476 = vld [vmem:[#allocation7 + $0x190] sm:$0xff]
    %v477 = vld [vmem:[#allocation7 + $0x198] sm:$0xff]
    %v478 = vld [vmem:[#allocation7 + $0x1a0] sm:$0xff]
    %v479 = vld [vmem:[#allocation7 + $0x1a8] sm:$0xff]
    %v480 = vld [vmem:[#allocation7 + $0x1b0] sm:$0xff]
    %v481 = vld [vmem:[#allocation7 + $0x1b8] sm:$0xff]
    %v482 = vld [vmem:[#allocation7 + $0x1c0] sm:$0xff]
    %v483 = vld [vmem:[#allocation7 + $0x1c8] sm:$0xff]
    %v484 = vld [vmem:[#allocation7 + $0x1d0] sm:$0xff]
    %v485 = vld [vmem:[#allocation7 + $0x1d8] sm:$0xff]
    %v486 = vld [vmem:[#allocation7 + $0x1e0] sm:$0xff]
    %v487 = vld [vmem:[#allocation7 + $0x1e8] sm:$0xff]
    %v488 = vld [vmem:[#allocation7 + $0x1f0] sm:$0xff]
    %v489 = vld [vmem:[#allocation7 + $0x1f8] sm:$0xff]
    %v490 = vld [vmem:[#allocation7 + $0x200] sm:$0xff]
    %v491 = vld [vmem:[#allocation7 + $0x208] sm:$0xff]
    %v492 = vld [vmem:[#allocation7 + $0x210] sm:$0xff]
    %v493 = vld [vmem:[#allocation7 + $0x218] sm:$0xff]
    %v494 = vld [vmem:[#allocation7 + $0x220] sm:$0xff]
    %v495 = vld [vmem:[#allocation7 + $0x228] sm:$0xff]
    %v496 = vld [vmem:[#allocation7 + $0x230] sm:$0xff]
    %v497 = vld [vmem:[#allocation7 + $0x238] sm:$0xff]
    %v498 = vld [vmem:[#allocation7 + $0x240] sm:$0xff]
    %v499 = vld [vmem:[#allocation7 + $0x248] sm:$0xff]
    %v500 = vld [vmem:[#allocation7 + $0x250] sm:$0xff]
    %v501 = vld [vmem:[#allocation7 + $0x258] sm:$0xff]
    %v502 = vld [vmem:[#allocation7 + $0x260] sm:$0xff]
    %v503 = vld [vmem:[#allocation7 + $0x268] sm:$0xff]
    %v504 = vld [vmem:[#allocation7 + $0x270] sm:$0xff]
    %v505 = vld [vmem:[#allocation7 + $0x278] sm:$0xff]
    %v506 = vld [vmem:[#allocation7 + $0x280] sm:$0xff]
    %v507 = vld [vmem:[#allocation7 + $0x288] sm:$0xff]
    %v508 = vld [vmem:[#allocation7 + $0x290] sm:$0xff]
    %v509 = vld [vmem:[#allocation7 + $0x298] sm:$0xff]
    %v510 = vld [vmem:[#allocation7 + $0x2a0] sm:$0xff]
    %v511 = vld [vmem:[#allocation7 + $0x2a8] sm:$0xff]
    %v512 = vld [vmem:[#allocation7 + $0x2b0] sm:$0xff]
    %v513 = vld [vmem:[#allocation7 + $0x2b8] sm:$0xff]
    %v514 = vld [vmem:[#allocation7 + $0x2c0] sm:$0xff]
    %v515 = vld [vmem:[#allocation7 + $0x2c8] sm:$0xff]
    %v516 = vld [vmem:[#allocation7 + $0x2d0] sm:$0xff]
    %v517 = vld [vmem:[#allocation7 + $0x2d8] sm:$0xff]
    %v518 = vld [vmem:[#allocation7 + $0x2e0] sm:$0xff]
    %v519 = vld [vmem:[#allocation7 + $0x2e8] sm:$0xff]
    %v520 = vld [vmem:[#allocation7 + $0x2f0] sm:$0xff]
    %v521 = vld [vmem:[#allocation7 + $0x2f8] sm:$0xff]
    %v522 = vld [vmem:[#allocation7 + $0x300] sm:$0xff]
    %v523 = vld [vmem:[#allocation7 + $0x308] sm:$0xff]
    %v524 = vld [vmem:[#allocation7 + $0x310] sm:$0xff]
    %v525 = vld [vmem:[#allocation7 + $0x318] sm:$0xff]
    %v526 = vld [vmem:[#allocation7 + $0x320] sm:$0xff]
    %v527 = vld [vmem:[#allocation7 + $0x328] sm:$0xff]
    %v528 = vld [vmem:[#allocation7 + $0x330] sm:$0xff]
    %v529 = vld [vmem:[#allocation7 + $0x338] sm:$0xff]
    %v530 = vld [vmem:[#allocation7 + $0x340] sm:$0xff]
    %v531 = vld [vmem:[#allocation7 + $0x348] sm:$0xff]
    %v532 = vld [vmem:[#allocation7 + $0x350] sm:$0xff]
    %v533 = vld [vmem:[#allocation7 + $0x358] sm:$0xff]
    %v534 = vld [vmem:[#allocation7 + $0x360] sm:$0xff]
    %v535 = vld [vmem:[#allocation7 + $0x368] sm:$0xff]
    %v536 = vld [vmem:[#allocation7 + $0x370] sm:$0xff]
    %v537 = vld [vmem:[#allocation7 + $0x378] sm:$0xff]
    %v538 = vld [vmem:[#allocation7 + $0x380] sm:$0xff]
    %v539 = vld [vmem:[#allocation7 + $0x388] sm:$0xff]
    %v540 = vld [vmem:[#allocation7 + $0x390] sm:$0xff]
    %v541 = vld [vmem:[#allocation7 + $0x398] sm:$0xff]
    %v542 = vld [vmem:[#allocation7 + $0x3a0] sm:$0xff]
    %v543 = vld [vmem:[#allocation7 + $0x3a8] sm:$0xff]
    %v544 = vld [vmem:[#allocation7 + $0x3b0] sm:$0xff]
    %v545 = vld [vmem:[#allocation7 + $0x3b8] sm:$0xff]
    %v546 = vld [vmem:[#allocation7 + $0x3c0] sm:$0xff]
    %v547 = vld [vmem:[#allocation7 + $0x3c8] sm:$0xff]
    %v548 = vld [vmem:[#allocation7 + $0x3d0] sm:$0xff]
    %v549 = vld [vmem:[#allocation7 + $0x3d8] sm:$0xff]
    %v550 = vld [vmem:[#allocation7 + $0x3e0] sm:$0xff]
    %v551 = vld [vmem:[#allocation7 + $0x3e8] sm:$0xff]
    %v552 = vld [vmem:[#allocation7 + $0x3f0] sm:$0xff]
    %v553 = vld [vmem:[#allocation7 + $0x3f8] sm:$0xff]
    %v554 = vld [vmem:[#allocation7 + $0x400] sm:$0xff]
    %v555 = vld [vmem:[#allocation7 + $0x408] sm:$0xff]
    %v556 = vld [vmem:[#allocation7 + $0x410] sm:$0xff]
    %v557 = vld [vmem:[#allocation7 + $0x418] sm:$0xff]
    %v558 = vld [vmem:[#allocation7 + $0x420] sm:$0xff]
    %v559 = vld [vmem:[#allocation7 + $0x428] sm:$0xff]
    %v560 = vld [vmem:[#allocation7 + $0x430] sm:$0xff]
    %v561 = vld [vmem:[#allocation7 + $0x438] sm:$0xff]
    %v562 = vld [vmem:[#allocation7 + $0x440] sm:$0xff]
    %v563 = vld [vmem:[#allocation7 + $0x448] sm:$0xff]
    %v564 = vld [vmem:[#allocation7 + $0x450] sm:$0xff]
    %v565 = vld [vmem:[#allocation7 + $0x458] sm:$0xff]
    %v566 = vld [vmem:[#allocation7 + $0x460] sm:$0xff]
    %v567 = vld [vmem:[#allocation7 + $0x468] sm:$0xff]
    %v568 = vld [vmem:[#allocation7 + $0x470] sm:$0xff]
    %v569 = vld [vmem:[#allocation7 + $0x478] sm:$0xff]
    %v570 = vld [vmem:[#allocation7 + $0x480] sm:$0xff]
    %v571 = vld [vmem:[#allocation7 + $0x488] sm:$0xff]
    %v572 = vld [vmem:[#allocation7 + $0x490] sm:$0xff]
    %v573 = vld [vmem:[#allocation7 + $0x498] sm:$0xff]
    %v574 = vld [vmem:[#allocation7 + $0x4a0] sm:$0xff]
    %v575 = vld [vmem:[#allocation7 + $0x4a8] sm:$0xff]
    %v576 = vld [vmem:[#allocation7 + $0x4b0] sm:$0xff]
    %v577 = vld [vmem:[#allocation7 + $0x4b8] sm:$0xff]
    %v578 = vld [vmem:[#allocation7 + $0x4c0] sm:$0xff]
    %v579 = vld [vmem:[#allocation7 + $0x4c8] sm:$0xff]
    %v580 = vld [vmem:[#allocation7 + $0x4d0] sm:$0xff]
    %v581 = vld [vmem:[#allocation7 + $0x4d8] sm:$0xff]
    %v582 = vld [vmem:[#allocation7 + $0x4e0] sm:$0xff]
    %v583 = vld [vmem:[#allocation7 + $0x4e8] sm:$0xff]
    %v584 = vld [vmem:[#allocation7 + $0x4f0] sm:$0xff]
    %v585 = vld [vmem:[#allocation7 + $0x4f8] sm:$0xff]
    %v586 = vld [vmem:[#allocation7 + $0x500] sm:$0xff]
    %v587 = vld [vmem:[#allocation7 + $0x508] sm:$0xff]
    %v588 = vld [vmem:[#allocation7 + $0x510] sm:$0xff]
    %v589 = vld [vmem:[#allocation7 + $0x518] sm:$0xff]
    %v590 = vld [vmem:[#allocation7 + $0x520] sm:$0xff]
    %v591 = vld [vmem:[#allocation7 + $0x528] sm:$0xff]
    %v592 = vld [vmem:[#allocation7 + $0x530] sm:$0xff]
    %v593 = vld [vmem:[#allocation7 + $0x538] sm:$0xff]
    %v594 = vld [vmem:[#allocation7 + $0x540] sm:$0xff]
    %v595 = vld [vmem:[#allocation7 + $0x548] sm:$0xff]
    %v596 = vld [vmem:[#allocation7 + $0x550] sm:$0xff]
    %v597 = vld [vmem:[#allocation7 + $0x558] sm:$0xff]
    %v598 = vld [vmem:[#allocation7 + $0x560] sm:$0xff]
    %v599 = vld [vmem:[#allocation7 + $0x568] sm:$0xff]
    %v600 = vld [vmem:[#allocation7 + $0x570] sm:$0xff]
    %v601 = vld [vmem:[#allocation7 + $0x578] sm:$0xff]
    %v602 = vld [vmem:[#allocation7 + $0x580] sm:$0xff]
    %v603 = vld [vmem:[#allocation7 + $0x588] sm:$0xff]
    %v604 = vld [vmem:[#allocation7 + $0x590] sm:$0xff]
    %v605 = vld [vmem:[#allocation7 + $0x598] sm:$0xff]
    %v606 = vld [vmem:[#allocation7 + $0x5a0] sm:$0xff]
    %v607 = vld [vmem:[#allocation7 + $0x5a8] sm:$0xff]
    %v608 = vld [vmem:[#allocation7 + $0x5b0] sm:$0xff]
    %v609 = vld [vmem:[#allocation7 + $0x5b8] sm:$0xff]
    %v610 = vld [vmem:[#allocation7 + $0x5c0] sm:$0xff]
    %v611 = vld [vmem:[#allocation7 + $0x5c8] sm:$0xff]
    %v612 = vld [vmem:[#allocation7 + $0x5d0] sm:$0xff]
    %v613 = vld [vmem:[#allocation7 + $0x5d8] sm:$0xff]
    %v614 = vld [vmem:[#allocation7 + $0x5e0] sm:$0xff]
    %v615 = vld [vmem:[#allocation7 + $0x5e8] sm:$0xff]
    %v616 = vld [vmem:[#allocation7 + $0x5f0] sm:$0xff]
    %v617 = vld [vmem:[#allocation7 + $0x5f8] sm:$0xff]
    %v618 = vld [vmem:[#allocation8] sm:$0x7]
    %v620 = vlaneseq
    %v621 = vshrl.u32 %v620, 7
    %v622 = vsub.s32 0, %v621
    %v623 = vrot.slane %v618, %v622
    %v624 = vlaneseq
    %v625 = vshrl.u32 %v624, 7
    %v626 = vsub.s32 1, %v625
    %v627 = vrot.slane %v618, %v626
    %v628 = vlaneseq
    %v629 = vshrl.u32 %v628, 7
    %v630 = vsub.s32 2, %v629
    %v631 = vrot.slane %v618, %v630
    %635 = vmatprep.subr.mxu0 %v472
    %636 = vmatpush1.msra.mxu0 %v471
    %637 = vmatprep.subr.mxu0 %v469
    %638 = vmatpush1.msra.mxu0 %v468
    %639 = vmatprep.subr.mxu0 %v466
    %640 = vmatpush1.msra.mxu0 %v465
    %641 = vmatprep.subr.mxu0 %v463
    %642 = vmatpush1.msra.mxu0 %v462
    %643 = vmatprep.subr.mxu0 %v460
    %644 = vmatpush1.msra.mxu0 %v459
    %645 = vmatprep.subr.mxu0 %v457
    %646 = vmatpush1.msra.mxu0 %v456
    %647 = vmatprep.subr.mxu0 %v454
    %648 = vmatpush1.msra.mxu0 %v453
    %649 = vmatprep.subr.mxu0 %v451
    %650 = vmatpush1.msra.mxu0 %v450
    %651 = vmatprep.subr.mxu0 %v448
    %652 = vmatpush1.msra.mxu0 %v447
    %653 = vmatprep.subr.mxu0 %v445
    %654 = vmatpush1.msra.mxu0 %v444
    %655 = vmatprep.subr.mxu0 %v442
    %656 = vmatpush1.msra.mxu0 %v441
    %657 = vmatprep.subr.mxu0 %v439
    %658 = vmatpush1.msra.mxu0 %v438
    %659 = vmatprep.subr.mxu0 %v436
    %660 = vmatpush1.msra.mxu0 %v435
    %661 = vmatprep.subr.mxu0 %v433
    %662 = vmatpush1.msra.mxu0 %v432
    %663 = vmatprep.subr.mxu0 %v430
    %664 = vmatpush1.msra.mxu0 %v429
    %665 = vmatprep.subr.mxu0 %v427
    %666 = vmatpush1.msra.mxu0 %v426
    %667 = vmatprep.subr.mxu0 %v520
    %668 = vmatpush2.msra.mxu0 %v519
    %669 = vmatprep.subr.mxu0 %v517
    %670 = vmatpush2.msra.mxu0 %v516
    %671 = vmatprep.subr.mxu0 %v514
    %672 = vmatpush2.msra.mxu0 %v513
    %673 = vmatprep.subr.mxu0 %v511
    %674 = vmatpush2.msra.mxu0 %v510
    %675 = vmatprep.subr.mxu0 %v508
    %676 = vmatpush2.msra.mxu0 %v507
    %677 = vmatprep.subr.mxu0 %v505
    %678 = vmatpush2.msra.mxu0 %v504
    %679 = vmatprep.subr.mxu0 %v502
    %680 = vmatpush2.msra.mxu0 %v501
    %681 = vmatprep.subr.mxu0 %v499
    %682 = vmatpush2.msra.mxu0 %v498
    %683 = vmatprep.subr.mxu0 %v496
    %684 = vmatpush2.msra.mxu0 %v495
    %685 = vmatprep.subr.mxu0 %v493
    %686 = vmatpush2.msra.mxu0 %v492
    %687 = vmatprep.subr.mxu0 %v490
    %688 = vmatpush2.msra.mxu0 %v489
    %689 = vmatprep.subr.mxu0 %v487
    %690 = vmatpush2.msra.mxu0 %v486
    %691 = vmatprep.subr.mxu0 %v484
    %692 = vmatpush2.msra.mxu0 %v483
    %693 = vmatprep.subr.mxu0 %v481
    %694 = vmatpush2.msra.mxu0 %v480
    %695 = vmatprep.subr.mxu0 %v478
    %696 = vmatpush2.msra.mxu0 %v477
    %697 = vmatprep.subr.mxu0 %v475
    %698 = vmatpush2.msra.mxu0 %v474
    %699 = vmatprep.mubr.f32.mxu0 %v423
    %700 = vmatmul.mubr.f32.gmra.mxu0 %v422
    %v701 = vpop.f32.mrf.mxu0
    %v702 = vadd.f32 %v623, %v701
    %v703 = vpop.f32.mrf.mxu0
    %v704 = vadd.f32 %v627, %v703
    %705 = vdwg.mxu0
    %706 = vmatprep.subr.mxu0 %v568
    %707 = vmatpush1.msra.mxu0 %v567
    %708 = vmatprep.subr.mxu0 %v565
    %709 = vmatpush1.msra.mxu0 %v564
    %710 = vmatprep.subr.mxu0 %v562
    %711 = vmatpush1.msra.mxu0 %v561
    %712 = vmatprep.subr.mxu0 %v559
    %713 = vmatpush1.msra.mxu0 %v558
    %714 = vmatprep.subr.mxu0 %v556
    %715 = vmatpush1.msra.mxu0 %v555
    %716 = vmatprep.subr.mxu0 %v553
    %717 = vmatpush1.msra.mxu0 %v552
    %718 = vmatprep.subr.mxu0 %v550
    %719 = vmatpush1.msra.mxu0 %v549
    %720 = vmatprep.subr.mxu0 %v547
    %721 = vmatpush1.msra.mxu0 %v546
    %722 = vmatprep.subr.mxu0 %v544
    %723 = vmatpush1.msra.mxu0 %v543
    %724 = vmatprep.subr.mxu0 %v541
    %725 = vmatpush1.msra.mxu0 %v540
    %726 = vmatprep.subr.mxu0 %v538
    %727 = vmatpush1.msra.mxu0 %v537
    %728 = vmatprep.subr.mxu0 %v535
    %729 = vmatpush1.msra.mxu0 %v534
    %730 = vmatprep.subr.mxu0 %v532
    %731 = vmatpush1.msra.mxu0 %v531
    %732 = vmatprep.subr.mxu0 %v529
    %733 = vmatpush1.msra.mxu0 %v528
    %734 = vmatprep.subr.mxu0 %v526
    %735 = vmatpush1.msra.mxu0 %v525
    %736 = vmatprep.subr.mxu0 %v523
    %737 = vmatpush1.msra.mxu0 %v522
    %738 = vmatprep.subr.mxu0 %v616
    %739 = vmatpush2.msra.mxu0 %v615
    %740 = vmatprep.subr.mxu0 %v613
    %741 = vmatpush2.msra.mxu0 %v612
    %742 = vmatprep.subr.mxu0 %v610
    %743 = vmatpush2.msra.mxu0 %v609
    %744 = vmatprep.subr.mxu0 %v607
    %745 = vmatpush2.msra.mxu0 %v606
    %746 = vmatprep.subr.mxu0 %v604
    %747 = vmatpush2.msra.mxu0 %v603
    %748 = vmatprep.subr.mxu0 %v601
    %749 = vmatpush2.msra.mxu0 %v600
    %750 = vmatprep.subr.mxu0 %v598
    %751 = vmatpush2.msra.mxu0 %v597
    %752 = vmatprep.subr.mxu0 %v595
    %753 = vmatpush2.msra.mxu0 %v594
    %754 = vmatprep.subr.mxu0 %v592
    %755 = vmatpush2.msra.mxu0 %v591
    %756 = vmatprep.subr.mxu0 %v589
    %757 = vmatpush2.msra.mxu0 %v588
    %758 = vmatprep.subr.mxu0 %v586
    %759 = vmatpush2.msra.mxu0 %v585
    %760 = vmatprep.subr.mxu0 %v583
    %761 = vmatpush2.msra.mxu0 %v582
    %762 = vmatprep.subr.mxu0 %v580
    %763 = vmatpush2.msra.mxu0 %v579
    %764 = vmatprep.subr.mxu0 %v577
    %765 = vmatpush2.msra.mxu0 %v576
    %766 = vmatprep.subr.mxu0 %v574
    %767 = vmatpush2.msra.mxu0 %v573
    %768 = vmatprep.subr.mxu0 %v571
    %769 = vmatpush2.msra.mxu0 %v570
    %770 = vmatprep.mubr.f32.mxu0 %v425
    %771 = vmatmul.mubr.f32.gmra.mxu0 %v424
    %v772 = vpop.f32.mrf.mxu0
    %v773 = vadd.f32 %v702, %v772
    %v774 = vpop.f32.mrf.mxu0
    %v775 = vadd.f32 %v704, %v774
    %776 = vdwg.mxu0
    %777 = vmatprep.subr.mxu0 0.0
    %778 = vmatpush1.msra.mxu0 %v473
    %779 = vmatprep.subr.mxu0 0.0
    %780 = vmatpush1.msra.mxu0 %v470
    %781 = vmatprep.subr.mxu0 0.0
    %782 = vmatpush1.msra.mxu0 %v467
    %783 = vmatprep.subr.mxu0 0.0
    %784 = vmatpush1.msra.mxu0 %v464
    %785 = vmatprep.subr.mxu0 0.0
    %786 = vmatpush1.msra.mxu0 %v461
    %787 = vmatprep.subr.mxu0 0.0
    %788 = vmatpush1.msra.mxu0 %v458
    %789 = vmatprep.subr.mxu0 0.0
    %790 = vmatpush1.msra.mxu0 %v455
    %791 = vmatprep.subr.mxu0 0.0
    %792 = vmatpush1.msra.mxu0 %v452
    %793 = vmatprep.subr.mxu0 0.0
    %794 = vmatpush1.msra.mxu0 %v449
    %795 = vmatprep.subr.mxu0 0.0
    %796 = vmatpush1.msra.mxu0 %v446
    %797 = vmatprep.subr.mxu0 0.0
    %798 = vmatpush1.msra.mxu0 %v443
    %799 = vmatprep.subr.mxu0 0.0
    %800 = vmatpush1.msra.mxu0 %v440
    %801 = vmatprep.subr.mxu0 0.0
    %802 = vmatpush1.msra.mxu0 %v437
    %803 = vmatprep.subr.mxu0 0.0
    %804 = vmatpush1.msra.mxu0 %v434
    %805 = vmatprep.subr.mxu0 0.0
    %806 = vmatpush1.msra.mxu0 %v431
    %807 = vmatprep.subr.mxu0 0.0
    %808 = vmatpush1.msra.mxu0 %v428
    %809 = vmatprep.subr.mxu0 0.0
    %810 = vmatpush2.msra.mxu0 %v521
    %811 = vmatprep.subr.mxu0 0.0
    %812 = vmatpush2.msra.mxu0 %v518
    %813 = vmatprep.subr.mxu0 0.0
    %814 = vmatpush2.msra.mxu0 %v515
    %815 = vmatprep.subr.mxu0 0.0
    %816 = vmatpush2.msra.mxu0 %v512
    %817 = vmatprep.subr.mxu0 0.0
    %818 = vmatpush2.msra.mxu0 %v509
    %819 = vmatprep.subr.mxu0 0.0
    %820 = vmatpush2.msra.mxu0 %v506
    %821 = vmatprep.subr.mxu0 0.0
    %822 = vmatpush2.msra.mxu0 %v503
    %823 = vmatprep.subr.mxu0 0.0
    %824 = vmatpush2.msra.mxu0 %v500
    %825 = vmatprep.subr.mxu0 0.0
    %826 = vmatpush2.msra.mxu0 %v497
    %827 = vmatprep.subr.mxu0 0.0
    %828 = vmatpush2.msra.mxu0 %v494
    %829 = vmatprep.subr.mxu0 0.0
    %830 = vmatpush2.msra.mxu0 %v491
    %831 = vmatprep.subr.mxu0 0.0
    %832 = vmatpush2.msra.mxu0 %v488
    %833 = vmatprep.subr.mxu0 0.0
    %834 = vmatpush2.msra.mxu0 %v485
    %835 = vmatprep.subr.mxu0 0.0
    %836 = vmatpush2.msra.mxu0 %v482
    %837 = vmatprep.subr.mxu0 0.0
    %838 = vmatpush2.msra.mxu0 %v479
    %839 = vmatprep.subr.mxu0 0.0
    %840 = vmatpush2.msra.mxu0 %v476
    %841 = vmatprep.mubr.f32.mxu0 %v423
    %842 = vmatmul.mubr.f32.gmra.mxu0 %v422
    %v843 = vpop.f32.mrf.mxu0
    %v844 = vadd.f32 %v631, %v843
    %v845 = vpop.f32.mrf.mxu0
    %846 = vdwg.mxu0
    %847 = vmatprep.subr.mxu0 0.0
    %848 = vmatpush1.msra.mxu0 %v569
    %849 = vmatprep.subr.mxu0 0.0
    %850 = vmatpush1.msra.mxu0 %v566
    %851 = vmatprep.subr.mxu0 0.0
    %852 = vmatpush1.msra.mxu0 %v563
    %853 = vmatprep.subr.mxu0 0.0
    %854 = vmatpush1.msra.mxu0 %v560
    %855 = vmatprep.subr.mxu0 0.0
    %856 = vmatpush1.msra.mxu0 %v557
    %857 = vmatprep.subr.mxu0 0.0
    %858 = vmatpush1.msra.mxu0 %v554
    %859 = vmatprep.subr.mxu0 0.0
    %860 = vmatpush1.msra.mxu0 %v551
    %861 = vmatprep.subr.mxu0 0.0
    %862 = vmatpush1.msra.mxu0 %v548
    %863 = vmatprep.subr.mxu0 0.0
    %864 = vmatpush1.msra.mxu0 %v545
    %865 = vmatprep.subr.mxu0 0.0
    %866 = vmatpush1.msra.mxu0 %v542
    %867 = vmatprep.subr.mxu0 0.0
    %868 = vmatpush1.msra.mxu0 %v539
    %869 = vmatprep.subr.mxu0 0.0
    %870 = vmatpush1.msra.mxu0 %v536
    %871 = vmatprep.subr.mxu0 0.0
    %872 = vmatpush1.msra.mxu0 %v533
    %873 = vmatprep.subr.mxu0 0.0
    %874 = vmatpush1.msra.mxu0 %v530
    %875 = vmatprep.subr.mxu0 0.0
    %876 = vmatpush1.msra.mxu0 %v527
    %877 = vmatprep.subr.mxu0 0.0
    %878 = vmatpush1.msra.mxu0 %v524
    %879 = vmatprep.subr.mxu0 0.0
    %880 = vmatpush2.msra.mxu0 %v617
    %881 = vmatprep.subr.mxu0 0.0
    %882 = vmatpush2.msra.mxu0 %v614
    %883 = vmatprep.subr.mxu0 0.0
    %884 = vmatpush2.msra.mxu0 %v611
    %885 = vmatprep.subr.mxu0 0.0
    %886 = vmatpush2.msra.mxu0 %v608
    %887 = vmatprep.subr.mxu0 0.0
    %888 = vmatpush2.msra.mxu0 %v605
    %889 = vmatprep.subr.mxu0 0.0
    %890 = vmatpush2.msra.mxu0 %v602
    %891 = vmatprep.subr.mxu0 0.0
    %892 = vmatpush2.msra.mxu0 %v599
    %893 = vmatprep.subr.mxu0 0.0
    %894 = vmatpush2.msra.mxu0 %v596
    %895 = vmatprep.subr.mxu0 0.0
    %896 = vmatpush2.msra.mxu0 %v593
    %897 = vmatprep.subr.mxu0 0.0
    %898 = vmatpush2.msra.mxu0 %v590
    %899 = vmatprep.subr.mxu0 0.0
    %900 = vmatpush2.msra.mxu0 %v587
    %901 = vmatprep.subr.mxu0 0.0
    %902 = vmatpush2.msra.mxu0 %v584
    %903 = vmatprep.subr.mxu0 0.0
    %904 = vmatpush2.msra.mxu0 %v581
    %905 = vmatprep.subr.mxu0 0.0
    %906 = vmatpush2.msra.mxu0 %v578
    %907 = vmatprep.subr.mxu0 0.0
    %908 = vmatpush2.msra.mxu0 %v575
    %909 = vmatprep.subr.mxu0 0.0
    %910 = vmatpush2.msra.mxu0 %v572
    %911 = vmatprep.mubr.f32.mxu0 %v425
    %912 = vmatmul.mubr.f32.gmra.mxu0 %v424
    %v913 = vpop.f32.mrf.mxu0
    %v914 = vadd.f32 %v844, %v913
    %v915 = vpop.f32.mrf.mxu0
    %916 = vdwg.mxu0
    %v917 = vmax.f32 %v773, 0.0
    %v918 = vmax.f32 %v775, 0.0
    %v919 = vmax.f32 %v914, 0.0
    %v920 = vld [vmem:[%s7] sm:$0x7]
    %v922 = vlaneseq
    %v923 = vshrl.u32 %v922, 7
    %v924 = vsub.s32 0, %v923
    %v925 = vrot.slane %v920, %v924
    %v926 = vlaneseq
    %v927 = vshrl.u32 %v926, 7
    %v928 = vsub.s32 1, %v927
    %v929 = vrot.slane %v920, %v928
    %v930 = vlaneseq
    %v931 = vshrl.u32 %v930, 7
    %v932 = vsub.s32 2, %v931
    %v933 = vrot.slane %v920, %v932
    %v937 = vmul.f32 %v917, %v925
    %v938 = vmul.f32 %v918, %v929
    %v939 = vmul.f32 %v919, %v933
    %v940 = vadd.f32 %v937, %v938
    %v941 = vadd.f32 %v940, %v939
    %942 = vadd.xlane.f32.xlu0 %v941
    %v943 = vpop.xlane.xlu0 %942
    %v944 = vld [vmem:[#allocation2] sm:$0x1]
    %v946 = vlaneseq
    %v947 = vshrl.u32 %v946, 7
    %v948 = vsub.s32 0, %v947
    %v949 = vrot.slane %v944, %v948
    %v951 = vadd.f32 %v943, %v949
    %vm952 = vcmask 7168
    %953 = vst.msk [vmem:[%s9] sm:$0xff] %vm952, %v951
    // Predicated region
    $region54: #{critic_forward.1} parent=1 // pred_check
      _
    $region55: #{critic_forward.1} parent=1 // pred_check_branch
      %955 = sbr.rel (0) target = $region57
    $region56: #{critic_forward.1} parent=1 // pred_region
      _
    $region57: #{critic_forward.1} parent=1 // pred_fallthru
      _
    // Predicated region
    $region58: #{critic_forward.1} parent=1 // pred_check
      _
    $region59: #{critic_forward.1} parent=1 // pred_check_branch
      %957 = sbr.rel (0) target = $region61
    $region60: #{critic_forward.1} parent=1 // pred_region
      _
    $region61: #{critic_forward.1} parent=1 // pred_fallthru
      _
    %958 = vsyncpa [#allocation4], 1
    %959 = vsyncpa [#allocation6], 1
    %960 = vsyncpa [#allocation9], 1

</llo_original>
